<compile_context>
chip_gen: v5e
topology: v5e:2x2
jax: 0.10.0
libtpu: 0.0.40
codegen_flags: <defaults>
</compile_context>

<pallas_src>
import functools

import numpy as np
import jax
import jax.numpy as jnp
from jax.experimental import pallas as pl
from jax.experimental.pallas import tpu as pltpu

K = 5            # kernel size of conv1 / conv2
PAD = 2          # padding of conv1 / conv2
NEG_SLOPE = 0.2
BN_EPS = 1e-5
LANE = 128
SUB = 8


def _leaky(z):
    return jnp.where(z >= 0, z, NEG_SLOPE * z)


def _round_up(x, m):
    return (x + m - 1) // m * m


def _fused_resblockT_kernel(xs_ref, tm_ref, lm_ref, pv_ref, w1_ref, w2_ref,
                            *rest, use_proj, inv_cnt):
    """Fused ConvTranspose1d(+BN+LeakyReLU) + Conv1d(+BN) + shortcut(+BN) + add + LeakyReLU.

    xs_ref : (C_in_p, Lp) f32   conv/shortcut input; lanes = flattened (batch, length)
    tm_ref : (K, 1, Lp)  f32    per-tap 0/1 mask (conv padding + batch boundaries + lane pad)
    lm_ref : (1, Lp)     f32    1.0 on valid (non-pad) lanes -- for BN statistics
    pv_ref : (C_out_p, 16) f32  packed per-channel params (biases / gammas / betas)
    w1_ref : (K, C_out_p, C_in_p)  bf16  conv1 per-tap weights (convT pre-lowered)
    w2_ref : (K, C_out_p, C_out_p) bf16  conv2 per-tap weights
    ws_ref : (C_out_p, C_in_p)     bf16  (only when use_proj) 1x1 shortcut weights
    o_ref  : (C_out_p, Lp) f32
    """
    if use_proj:
        ws_ref, o_ref = rest
    else:
        (o_ref,) = rest

    Lp = xs_ref.shape[1]
    lm = lm_ref[...]                                   # (1, Lp)

    def col(i):                                        # packed per-channel column
        return pv_ref[:, i:i + 1]                      # (C_out_p, 1)

    def conv5(w_ref, src):
        """5-tap conv along the flattened lane axis via K tap-accumulated matmuls.
        Tap shift = lane roll (XLU); edge handling = precomputed 0/1 mask (VPU)."""
        acc = None
        for k in range(K):
            s = (PAD - k) % Lp
            rolled = src if s == 0 else pltpu.roll(src, shift=s, axis=1)
            masked = (rolled * tm_ref[k]).astype(jnp.bfloat16)
            p = jnp.dot(w_ref[k], masked, preferred_element_type=jnp.float32)
            acc = p if acc is None else acc + p
        return acc

    def bn(y, gi, bi):
        """Training-mode BatchNorm over valid lanes, biased variance, centered 2nd pass."""
        m = jnp.sum(y * lm, axis=1, keepdims=True) * inv_cnt
        d = (y - m) * lm
        v = jnp.sum(d * d, axis=1, keepdims=True) * inv_cnt
        return (y - m) * jax.lax.rsqrt(v + BN_EPS) * col(gi) + col(bi)

    xs = xs_ref[...]                                   # (C_in_p, Lp) f32

    # conv1: ConvTranspose1d pre-lowered (wrapper zero-stuffs + flips taps) -> plain conv
    h = _leaky(bn(conv5(w1_ref, xs) + col(0), 1, 2))

    # conv2: Conv1d(k=5, pad=2)
    y2 = bn(conv5(w2_ref, h) + col(3), 4, 5)

    # shortcut: 1x1 ConvTranspose + BN, or identity
    if use_proj:
        r = jnp.dot(ws_ref[...], xs.astype(jnp.bfloat16),
                    preferred_element_type=jnp.float32) + col(6)
        r = bn(r, 7, 8)
    else:
        r = xs

    o_ref[...] = _leaky(y2 + r)


def residual_block_transpose(x, params, stride=1):
    """x: (N, C_in, L) float32 -> (N, C_out, L*stride) float32."""
    N, C_in, L = x.shape
    w1 = params["conv1_w"]                  # ConvTranspose1d weight: (C_in, C_out, K)
    C_out = w1.shape[1]
    use_proj = (C_in != C_out) or (stride != 1)
    op = stride - 1
    L_out = L * stride
    NL = N * L_out
    C1p = _round_up(C_in, SUB)
    Cop = _round_up(C_out, SUB)
    Lp = _round_up(NL, LANE)                # lane-dense flattened (batch, length) axis

    x = x.astype(jnp.float32)

    # --- zero-stuffing for the transposed conv (reshape interleave, no scatter) ------
    if stride > 1:
        z = jnp.zeros((N, C_in, L, stride - 1), jnp.float32)
        u = jnp.concatenate([x[..., None], z], axis=-1).reshape(N, C_in, L * stride)
        u = u[:, :, :(L - 1) * stride + 1]
    else:
        u = x
    u = jnp.pad(u, ((0, 0), (0, 0), (0, op)))                       # (N, C_in, L_out)

    # flatten batch into lanes; pad channels to x8 sublanes and lanes to x128
    xs = jnp.transpose(u, (1, 0, 2)).reshape(C_in, NL)
    xs = jnp.pad(xs, ((0, C1p - C_in), (0, Lp - NL)))               # (C1p, Lp) f32

    # --- per-tap weight matrices (bf16 MXU operands) ----------------------------------
    # convT -> conv lowering: flip taps, swap channel axes
    w1t = jnp.transpose(w1.astype(jnp.float32)[:, :, ::-1], (2, 1, 0))   # (K, Cout, Cin)
    w1t = jnp.pad(w1t, ((0, 0), (0, Cop - C_out), (0, C1p - C_in))).astype(jnp.bfloat16)
    w2t = jnp.transpose(params["conv2_w"].astype(jnp.float32), (2, 0, 1))  # (K, Cout, Cout)
    w2t = jnp.pad(w2t, ((0, 0), (0, Cop - C_out), (0, Cop - C_out))).astype(jnp.bfloat16)

    # --- packed per-channel params: one small operand instead of many (C,1) DMAs -----
    vecs = [params["conv1_b"], params["bn1_g"], params["bn1_b"],
            params["conv2_b"], params["bn2_g"], params["bn2_b"]]
    if use_proj:
        vecs += [params["short_b"], params["shortbn_g"], params["shortbn_b"]]
    cols = [jnp.pad(jnp.asarray(v, jnp.float32).reshape(-1), (0, Cop - C_out))
            for v in vecs]
    while len(cols) < 16:
        cols.append(jnp.zeros((Cop,), jnp.float32))
    pv = jnp.stack(cols, axis=1)                                    # (Cop, 16)

    # --- precomputed masks (host-side numpy, tiny) ------------------------------------
    t_np = np.arange(Lp) % L_out
    valid_np = np.arange(Lp) < NL
    tap_np = np.zeros((K, 1, Lp), np.float32)
    for k in range(K):
        d = k - PAD
        tap_np[k, 0] = ((t_np + d >= 0) & (t_np + d < L_out) & valid_np)
    tapmask = jnp.asarray(tap_np)                                   # (K, 1, Lp) f32
    lanemask = jnp.asarray(valid_np.astype(np.float32)).reshape(1, Lp)

    args = [xs, tapmask, lanemask, pv, w1t, w2t]
    if use_proj:
        ws = jnp.transpose(params["short_w"].astype(jnp.float32)[:, :, 0], (1, 0))
        ws = jnp.pad(ws, ((0, Cop - C_out), (0, C1p - C_in))).astype(jnp.bfloat16)
        args.append(ws)

    # --- scoped-VMEM limit sized from the actual buffers ------------------------------
    op_bytes = sum(int(np.prod(a.shape)) * a.dtype.itemsize for a in args)
    out_bytes = Cop * Lp * 4
    inter_bytes = 12 * Cop * Lp * 4 + 4 * C1p * Lp * 4
    vmem_limit = int(min(100 * 2**20,
                         max(16 * 2**20,
                             2 * (op_bytes + out_bytes) + inter_bytes + (4 << 20))))

    out_flat = pl.pallas_call(
        functools.partial(_fused_resblockT_kernel,
                          use_proj=use_proj, inv_cnt=1.0 / NL),
        out_shape=jax.ShapeDtypeStruct((Cop, Lp), jnp.float32),
        in_specs=[pl.BlockSpec(memory_space=pltpu.MemorySpace.VMEM)] * len(args),
        out_specs=pl.BlockSpec(memory_space=pltpu.MemorySpace.VMEM),
        compiler_params=pltpu.CompilerParams(vmem_limit_bytes=vmem_limit),
    )(*args)

    # crop channel / lane padding and go back to NCL
    out = out_flat[:C_out, :NL].reshape(C_out, N, L_out)
    return jnp.transpose(out, (1, 0, 2))


# ---------------- numpy reference (PyTorch semantics, training-mode BN) --------------
def _np_reference(x, p, stride):
    x = x.astype(np.float64)

    def convT(inp, W, b, s, pad, op):
        N, Cin, Lin = inp.shape
        _, Cout, Kk = W.shape
        Lout = (Lin - 1) * s - 2 * pad + Kk + op
        y = np.zeros((N, Cout, Lout))
        for n in range(N):
            for m in range(Lin):
                for k in range(Kk):
                    t = m * s - pad + k
                    if 0 <= t < Lout:
                        y[n, :, t] += W[:, :, k].T.astype(np.float64) @ inp[n, :, m]
        return y + b[None, :, None]

    def conv(inp, W, b, pad):
        N, _, Lin = inp.shape
        Cout, _, Kk = W.shape
        xp = np.pad(inp, ((0, 0), (0, 0), (pad, pad)))
        y = np.zeros((N, Cout, Lin))
        for n in range(N):
            for t in range(Lin):
                for k in range(Kk):
                    y[n, :, t] += W[:, :, k].astype(np.float64) @ xp[n, :, t + k]
        return y + b[None, :, None]

    def bn(z, g, be):
        m = z.mean(axis=(0, 2), keepdims=True)
        v = z.var(axis=(0, 2), keepdims=True)   # biased variance (PyTorch normalization)
        return (z - m) / np.sqrt(v + BN_EPS) * g[None, :, None] + be[None, :, None]

    lrelu = lambda z: np.where(z > 0, z, NEG_SLOPE * z)

    C_in, C_out = p["conv1_w"].shape[0], p["conv1_w"].shape[1]
    use_proj = (C_in != C_out) or (stride != 1)
    if use_proj:
        res = bn(convT(x, p["short_w"], p["short_b"], stride, 0, stride - 1),
                 p["shortbn_g"], p["shortbn_b"])
    else:
        res = x
    h = lrelu(bn(convT(x, p["conv1_w"], p["conv1_b"], stride, PAD, stride - 1),
                 p["bn1_g"], p["bn1_b"]))
    out = bn(conv(h, p["conv2_w"], p["conv2_b"], PAD), p["bn2_g"], p["bn2_b"]) + res
    return lrelu(out)


if __name__ == "__main__":
    def make_params(key, C_in, C_out):
        ks = jax.random.split(key, 6)
        return {
            "conv1_w": 0.2 * jax.random.normal(ks[0], (C_in, C_out, K), jnp.float32),
            "conv1_b": 0.1 * jax.random.normal(ks[1], (C_out,), jnp.float32),
            "bn1_g": jnp.ones((C_out,), jnp.float32),
            "bn1_b": jnp.zeros((C_out,), jnp.float32),
            "conv2_w": 0.2 * jax.random.normal(ks[2], (C_out, C_out, K), jnp.float32),
            "conv2_b": 0.1 * jax.random.normal(ks[3], (C_out,), jnp.float32),
            "bn2_g": jnp.ones((C_out,), jnp.float32),
            "bn2_b": jnp.zeros((C_out,), jnp.float32),
            "short_w": 0.2 * jax.random.normal(ks[4], (C_in, C_out, 1), jnp.float32),
            "short_b": 0.1 * jax.random.normal(ks[5], (C_out,), jnp.float32),
            "shortbn_g": jnp.ones((C_out,), jnp.float32),
            "shortbn_b": jnp.zeros((C_out,), jnp.float32),
        }

    key = jax.random.PRNGKey(0)
    k1, k2, k3, k4 = jax.random.split(key, 4)

    # Tolerance accommodates bf16 MXU operands (weights + shifted activations).
    TOL = dict(rtol=2e-2, atol=2e-2)

    # --- Config A: projection shortcut (C_in != C_out, stride=2) ---------------------
    N, C_in, C_out, L, stride = 2, 4, 8, 16, 2
    x = jax.random.normal(k1, (N, C_in, L), jnp.float32)
    params = make_params(k2, C_in, C_out)
    out = jax.block_until_ready(residual_block_transpose(x, params, stride=stride))
    assert out.shape == (N, C_out, L * stride) and out.dtype == jnp.float32
    ref = _np_reference(np.asarray(x),
                        {k: np.asarray(v) for k, v in params.items()}, stride)
    np.testing.assert_allclose(np.asarray(out), ref, **TOL)

    # --- Config B: identity shortcut (C_in == C_out, stride=1) -----------------------
    N2, C, L2 = 2, 8, 16
    x_b = jax.random.normal(k3, (N2, C, L2), jnp.float32)
    params_b = make_params(k4, C, C)
    out_b = jax.block_until_ready(residual_block_transpose(x_b, params_b, stride=1))
    assert out_b.shape == (N2, C, L2) and out_b.dtype == jnp.float32
    ref_b = _np_reference(np.asarray(x_b),
                          {k: np.asarray(v) for k, v in params_b.items()}, 1)
    np.testing.assert_allclose(np.asarray(out_b), ref_b, **TOL)

    print("KERNEL_OK")
</pallas_src>

<mosaic_0001>
module attributes {stable_mosaic.version = 11 : i64} {
  func.func @_fused_resblockT_kernel(%arg0: memref<8x128xf32, #tpu.memory_space<vmem>>, %arg1: memref<5x1x128xf32, #tpu.memory_space<vmem>>, %arg2: memref<1x128xf32, #tpu.memory_space<vmem>>, %arg3: memref<8x16xf32, #tpu.memory_space<vmem>>, %arg4: memref<5x8x8xbf16, #tpu.memory_space<vmem>>, %arg5: memref<5x8x8xbf16, #tpu.memory_space<vmem>>, %arg6: memref<8x8xbf16, #tpu.memory_space<vmem>>, %arg7: memref<8x128xf32, #tpu.memory_space<vmem>>) attributes {dimension_semantics = [], scalar_prefetch = 0 : i64, scratch_operands = 0 : i64, tpu.core_type = #tpu.core_type<tc>} {
    %c0 = arith.constant 0 : index
    %c0_0 = arith.constant 0 : index
    %0 = vector.load %arg2[%c0, %c0_0] : memref<1x128xf32, #tpu.memory_space<vmem>>, vector<1x128xf32>
    %c0_1 = arith.constant 0 : index
    %c0_2 = arith.constant 0 : index
    %1 = vector.load %arg0[%c0_1, %c0_2] : memref<8x128xf32, #tpu.memory_space<vmem>>, vector<8x128xf32>
    %c2_i32 = arith.constant 2 : i32
    %2 = tpu.dynamic_rotate %1 by %c2_i32 dim 1 : vector<8x128xf32>, i32 -> vector<8x128xf32>
    %c0_3 = arith.constant 0 : index
    %c0_4 = arith.constant 0 : index
    %c0_5 = arith.constant 0 : index
    %3 = vector.load %arg1[%c0_3, %c0_4, %c0_5] : memref<5x1x128xf32, #tpu.memory_space<vmem>>, vector<1x1x128xf32>
    %4 = vector.shape_cast %3 : vector<1x1x128xf32> to vector<1x128xf32>
    %5 = vector.broadcast %4 : vector<1x128xf32> to vector<8x128xf32>
    %6 = arith.mulf %2, %5 : vector<8x128xf32>
    %7 = arith.truncf %6 : vector<8x128xf32> to vector<8x128xbf16>
    %c0_6 = arith.constant 0 : index
    %c0_7 = arith.constant 0 : index
    %c0_8 = arith.constant 0 : index
    %8 = vector.load %arg4[%c0_6, %c0_7, %c0_8] : memref<5x8x8xbf16, #tpu.memory_space<vmem>>, vector<1x8x8xbf16>
    %9 = vector.shape_cast %8 : vector<1x8x8xbf16> to vector<8x8xbf16>
    %cst = arith.constant dense<0.000000e+00> : vector<8x128xf32>
    %10 = tpu.matmul %9, %7, %cst {dimension_numbers = #tpu.dot_dimension_numbers<[1], [0], [0], [1], [0, 0, 1, 1], [], []>} : vector<8x8xbf16>, vector<8x128xbf16>, vector<8x128xf32> -> vector<8x128xf32>
    %c1_i32 = arith.constant 1 : i32
    %11 = tpu.dynamic_rotate %1 by %c1_i32 dim 1 : vector<8x128xf32>, i32 -> vector<8x128xf32>
    %c1 = arith.constant 1 : index
    %c0_9 = arith.constant 0 : index
    %c0_10 = arith.constant 0 : index
    %12 = vector.load %arg1[%c1, %c0_9, %c0_10] : memref<5x1x128xf32, #tpu.memory_space<vmem>>, vector<1x1x128xf32>
    %13 = vector.shape_cast %12 : vector<1x1x128xf32> to vector<1x128xf32>
    %14 = vector.broadcast %13 : vector<1x128xf32> to vector<8x128xf32>
    %15 = arith.mulf %11, %14 : vector<8x128xf32>
    %16 = arith.truncf %15 : vector<8x128xf32> to vector<8x128xbf16>
    %c1_11 = arith.constant 1 : index
    %c0_12 = arith.constant 0 : index
    %c0_13 = arith.constant 0 : index
    %17 = vector.load %arg4[%c1_11, %c0_12, %c0_13] : memref<5x8x8xbf16, #tpu.memory_space<vmem>>, vector<1x8x8xbf16>
    %18 = vector.shape_cast %17 : vector<1x8x8xbf16> to vector<8x8xbf16>
    %cst_14 = arith.constant dense<0.000000e+00> : vector<8x128xf32>
    %19 = tpu.matmul %18, %16, %cst_14 {dimension_numbers = #tpu.dot_dimension_numbers<[1], [0], [0], [1], [0, 0, 1, 1], [], []>} : vector<8x8xbf16>, vector<8x128xbf16>, vector<8x128xf32> -> vector<8x128xf32>
    %20 = arith.addf %10, %19 : vector<8x128xf32>
    %c2 = arith.constant 2 : index
    %c0_15 = arith.constant 0 : index
    %c0_16 = arith.constant 0 : index
    %21 = vector.load %arg1[%c2, %c0_15, %c0_16] : memref<5x1x128xf32, #tpu.memory_space<vmem>>, vector<1x1x128xf32>
    %22 = vector.shape_cast %21 : vector<1x1x128xf32> to vector<1x128xf32>
    %23 = vector.broadcast %22 : vector<1x128xf32> to vector<8x128xf32>
    %24 = arith.mulf %1, %23 : vector<8x128xf32>
    %25 = arith.truncf %24 : vector<8x128xf32> to vector<8x128xbf16>
    %c2_17 = arith.constant 2 : index
    %c0_18 = arith.constant 0 : index
    %c0_19 = arith.constant 0 : index
    %26 = vector.load %arg4[%c2_17, %c0_18, %c0_19] : memref<5x8x8xbf16, #tpu.memory_space<vmem>>, vector<1x8x8xbf16>
    %27 = vector.shape_cast %26 : vector<1x8x8xbf16> to vector<8x8xbf16>
    %cst_20 = arith.constant dense<0.000000e+00> : vector<8x128xf32>
    %28 = tpu.matmul %27, %25, %cst_20 {dimension_numbers = #tpu.dot_dimension_numbers<[1], [0], [0], [1], [0, 0, 1, 1], [], []>} : vector<8x8xbf16>, vector<8x128xbf16>, vector<8x128xf32> -> vector<8x128xf32>
    %29 = arith.addf %20, %28 : vector<8x128xf32>
    %c127_i32 = arith.constant 127 : i32
    %30 = tpu.dynamic_rotate %1 by %c127_i32 dim 1 : vector<8x128xf32>, i32 -> vector<8x128xf32>
    %c3 = arith.constant 3 : index
    %c0_21 = arith.constant 0 : index
    %c0_22 = arith.constant 0 : index
    %31 = vector.load %arg1[%c3, %c0_21, %c0_22] : memref<5x1x128xf32, #tpu.memory_space<vmem>>, vector<1x1x128xf32>
    %32 = vector.shape_cast %31 : vector<1x1x128xf32> to vector<1x128xf32>
    %33 = vector.broadcast %32 : vector<1x128xf32> to vector<8x128xf32>
    %34 = arith.mulf %30, %33 : vector<8x128xf32>
    %35 = arith.truncf %34 : vector<8x128xf32> to vector<8x128xbf16>
    %c3_23 = arith.constant 3 : index
    %c0_24 = arith.constant 0 : index
    %c0_25 = arith.constant 0 : index
    %36 = vector.load %arg4[%c3_23, %c0_24, %c0_25] : memref<5x8x8xbf16, #tpu.memory_space<vmem>>, vector<1x8x8xbf16>
    %37 = vector.shape_cast %36 : vector<1x8x8xbf16> to vector<8x8xbf16>
    %cst_26 = arith.constant dense<0.000000e+00> : vector<8x128xf32>
    %38 = tpu.matmul %37, %35, %cst_26 {dimension_numbers = #tpu.dot_dimension_numbers<[1], [0], [0], [1], [0, 0, 1, 1], [], []>} : vector<8x8xbf16>, vector<8x128xbf16>, vector<8x128xf32> -> vector<8x128xf32>
    %39 = arith.addf %29, %38 : vector<8x128xf32>
    %c126_i32 = arith.constant 126 : i32
    %40 = tpu.dynamic_rotate %1 by %c126_i32 dim 1 : vector<8x128xf32>, i32 -> vector<8x128xf32>
    %c4 = arith.constant 4 : index
    %c0_27 = arith.constant 0 : index
    %c0_28 = arith.constant 0 : index
    %41 = vector.load %arg1[%c4, %c0_27, %c0_28] : memref<5x1x128xf32, #tpu.memory_space<vmem>>, vector<1x1x128xf32>
    %42 = vector.shape_cast %41 : vector<1x1x128xf32> to vector<1x128xf32>
    %43 = vector.broadcast %42 : vector<1x128xf32> to vector<8x128xf32>
    %44 = arith.mulf %40, %43 : vector<8x128xf32>
    %45 = arith.truncf %44 : vector<8x128xf32> to vector<8x128xbf16>
    %c4_29 = arith.constant 4 : index
    %c0_30 = arith.constant 0 : index
    %c0_31 = arith.constant 0 : index
    %46 = vector.load %arg4[%c4_29, %c0_30, %c0_31] : memref<5x8x8xbf16, #tpu.memory_space<vmem>>, vector<1x8x8xbf16>
    %47 = vector.shape_cast %46 : vector<1x8x8xbf16> to vector<8x8xbf16>
    %cst_32 = arith.constant dense<0.000000e+00> : vector<8x128xf32>
    %48 = tpu.matmul %47, %45, %cst_32 {dimension_numbers = #tpu.dot_dimension_numbers<[1], [0], [0], [1], [0, 0, 1, 1], [], []>} : vector<8x8xbf16>, vector<8x128xbf16>, vector<8x128xf32> -> vector<8x128xf32>
    %49 = arith.addf %39, %48 : vector<8x128xf32>
    %c0_33 = arith.constant 0 : index
    %c0_34 = arith.constant 0 : index
    %50 = vector.load %arg3[%c0_33, %c0_34] : memref<8x16xf32, #tpu.memory_space<vmem>>, vector<8x1xf32>
    %51 = vector.broadcast %50 : vector<8x1xf32> to vector<8x128xf32>
    %52 = arith.addf %49, %51 : vector<8x128xf32>
    %53 = vector.broadcast %0 : vector<1x128xf32> to vector<8x128xf32>
    %54 = arith.mulf %52, %53 : vector<8x128xf32>
    %cst_35 = arith.constant dense<0.000000e+00> : vector<8xf32>
    %55 = vector.multi_reduction <add>, %54, %cst_35 [1] : vector<8x128xf32> to vector<8xf32>
    %56 = vector.shape_cast %55 : vector<8xf32> to vector<8x1xf32>
    %cst_36 = arith.constant 1.562500e-02 : f32
    %57 = vector.broadcast %cst_36 : f32 to vector<8x1xf32>
    %58 = arith.mulf %56, %57 : vector<8x1xf32>
    %59 = vector.broadcast %58 : vector<8x1xf32> to vector<8x128xf32>
    %60 = arith.subf %52, %59 : vector<8x128xf32>
    %61 = vector.broadcast %0 : vector<1x128xf32> to vector<8x128xf32>
    %62 = arith.mulf %60, %61 : vector<8x128xf32>
    %63 = arith.mulf %62, %62 : vector<8x128xf32>
    %cst_37 = arith.constant dense<0.000000e+00> : vector<8xf32>
    %64 = vector.multi_reduction <add>, %63, %cst_37 [1] : vector<8x128xf32> to vector<8xf32>
    %65 = vector.shape_cast %64 : vector<8xf32> to vector<8x1xf32>
    %cst_38 = arith.constant 1.562500e-02 : f32
    %66 = vector.broadcast %cst_38 : f32 to vector<8x1xf32>
    %67 = arith.mulf %65, %66 : vector<8x1xf32>
    %68 = vector.broadcast %58 : vector<8x1xf32> to vector<8x128xf32>
    %69 = arith.subf %52, %68 : vector<8x128xf32>
    %cst_39 = arith.constant 9.99999974E-6 : f32
    %70 = vector.broadcast %cst_39 : f32 to vector<8x1xf32>
    %71 = arith.addf %67, %70 : vector<8x1xf32>
    %72 = math.rsqrt %71 : vector<8x1xf32>
    %73 = vector.broadcast %72 : vector<8x1xf32> to vector<8x128xf32>
    %74 = arith.mulf %69, %73 : vector<8x128xf32>
    %c0_40 = arith.constant 0 : index
    %c1_41 = arith.constant 1 : index
    %75 = vector.load %arg3[%c0_40, %c1_41] : memref<8x16xf32, #tpu.memory_space<vmem>>, vector<8x1xf32>
    %76 = vector.broadcast %75 : vector<8x1xf32> to vector<8x128xf32>
    %77 = arith.mulf %74, %76 : vector<8x128xf32>
    %c0_42 = arith.constant 0 : index
    %c2_43 = arith.constant 2 : index
    %78 = vector.load %arg3[%c0_42, %c2_43] : memref<8x16xf32, #tpu.memory_space<vmem>>, vector<8x1xf32>
    %79 = vector.broadcast %78 : vector<8x1xf32> to vector<8x128xf32>
    %80 = arith.addf %77, %79 : vector<8x128xf32>
    %cst_44 = arith.constant 0.000000e+00 : f32
    %81 = vector.broadcast %cst_44 : f32 to vector<8x128xf32>
    %82 = arith.cmpf oge, %80, %81 : vector<8x128xf32>
    %cst_45 = arith.constant 2.000000e-01 : f32
    %83 = vector.broadcast %cst_45 : f32 to vector<8x128xf32>
    %84 = arith.mulf %83, %80 : vector<8x128xf32>
    %85 = arith.select %82, %80, %84 : vector<8x128xi1>, vector<8x128xf32>
    %c2_i32_46 = arith.constant 2 : i32
    %86 = tpu.dynamic_rotate %85 by %c2_i32_46 dim 1 : vector<8x128xf32>, i32 -> vector<8x128xf32>
    %c0_47 = arith.constant 0 : index
    %c0_48 = arith.constant 0 : index
    %c0_49 = arith.constant 0 : index
    %87 = vector.load %arg1[%c0_47, %c0_48, %c0_49] : memref<5x1x128xf32, #tpu.memory_space<vmem>>, vector<1x1x128xf32>
    %88 = vector.shape_cast %87 : vector<1x1x128xf32> to vector<1x128xf32>
    %89 = vector.broadcast %88 : vector<1x128xf32> to vector<8x128xf32>
    %90 = arith.mulf %86, %89 : vector<8x128xf32>
    %91 = arith.truncf %90 : vector<8x128xf32> to vector<8x128xbf16>
    %c0_50 = arith.constant 0 : index
    %c0_51 = arith.constant 0 : index
    %c0_52 = arith.constant 0 : index
    %92 = vector.load %arg5[%c0_50, %c0_51, %c0_52] : memref<5x8x8xbf16, #tpu.memory_space<vmem>>, vector<1x8x8xbf16>
    %93 = vector.shape_cast %92 : vector<1x8x8xbf16> to vector<8x8xbf16>
    %cst_53 = arith.constant dense<0.000000e+00> : vector<8x128xf32>
    %94 = tpu.matmul %93, %91, %cst_53 {dimension_numbers = #tpu.dot_dimension_numbers<[1], [0], [0], [1], [0, 0, 1, 1], [], []>} : vector<8x8xbf16>, vector<8x128xbf16>, vector<8x128xf32> -> vector<8x128xf32>
    %c1_i32_54 = arith.constant 1 : i32
    %95 = tpu.dynamic_rotate %85 by %c1_i32_54 dim 1 : vector<8x128xf32>, i32 -> vector<8x128xf32>
    %c1_55 = arith.constant 1 : index
    %c0_56 = arith.constant 0 : index
    %c0_57 = arith.constant 0 : index
    %96 = vector.load %arg1[%c1_55, %c0_56, %c0_57] : memref<5x1x128xf32, #tpu.memory_space<vmem>>, vector<1x1x128xf32>
    %97 = vector.shape_cast %96 : vector<1x1x128xf32> to vector<1x128xf32>
    %98 = vector.broadcast %97 : vector<1x128xf32> to vector<8x128xf32>
    %99 = arith.mulf %95, %98 : vector<8x128xf32>
    %100 = arith.truncf %99 : vector<8x128xf32> to vector<8x128xbf16>
    %c1_58 = arith.constant 1 : index
    %c0_59 = arith.constant 0 : index
    %c0_60 = arith.constant 0 : index
    %101 = vector.load %arg5[%c1_58, %c0_59, %c0_60] : memref<5x8x8xbf16, #tpu.memory_space<vmem>>, vector<1x8x8xbf16>
    %102 = vector.shape_cast %101 : vector<1x8x8xbf16> to vector<8x8xbf16>
    %cst_61 = arith.constant dense<0.000000e+00> : vector<8x128xf32>
    %103 = tpu.matmul %102, %100, %cst_61 {dimension_numbers = #tpu.dot_dimension_numbers<[1], [0], [0], [1], [0, 0, 1, 1], [], []>} : vector<8x8xbf16>, vector<8x128xbf16>, vector<8x128xf32> -> vector<8x128xf32>
    %104 = arith.addf %94, %103 : vector<8x128xf32>
    %c2_62 = arith.constant 2 : index
    %c0_63 = arith.constant 0 : index
    %c0_64 = arith.constant 0 : index
    %105 = vector.load %arg1[%c2_62, %c0_63, %c0_64] : memref<5x1x128xf32, #tpu.memory_space<vmem>>, vector<1x1x128xf32>
    %106 = vector.shape_cast %105 : vector<1x1x128xf32> to vector<1x128xf32>
    %107 = vector.broadcast %106 : vector<1x128xf32> to vector<8x128xf32>
    %108 = arith.mulf %85, %107 : vector<8x128xf32>
    %109 = arith.truncf %108 : vector<8x128xf32> to vector<8x128xbf16>
    %c2_65 = arith.constant 2 : index
    %c0_66 = arith.constant 0 : index
    %c0_67 = arith.constant 0 : index
    %110 = vector.load %arg5[%c2_65, %c0_66, %c0_67] : memref<5x8x8xbf16, #tpu.memory_space<vmem>>, vector<1x8x8xbf16>
    %111 = vector.shape_cast %110 : vector<1x8x8xbf16> to vector<8x8xbf16>
    %cst_68 = arith.constant dense<0.000000e+00> : vector<8x128xf32>
    %112 = tpu.matmul %111, %109, %cst_68 {dimension_numbers = #tpu.dot_dimension_numbers<[1], [0], [0], [1], [0, 0, 1, 1], [], []>} : vector<8x8xbf16>, vector<8x128xbf16>, vector<8x128xf32> -> vector<8x128xf32>
    %113 = arith.addf %104, %112 : vector<8x128xf32>
    %c127_i32_69 = arith.constant 127 : i32
    %114 = tpu.dynamic_rotate %85 by %c127_i32_69 dim 1 : vector<8x128xf32>, i32 -> vector<8x128xf32>
    %c3_70 = arith.constant 3 : index
    %c0_71 = arith.constant 0 : index
    %c0_72 = arith.constant 0 : index
    %115 = vector.load %arg1[%c3_70, %c0_71, %c0_72] : memref<5x1x128xf32, #tpu.memory_space<vmem>>, vector<1x1x128xf32>
    %116 = vector.shape_cast %115 : vector<1x1x128xf32> to vector<1x128xf32>
    %117 = vector.broadcast %116 : vector<1x128xf32> to vector<8x128xf32>
    %118 = arith.mulf %114, %117 : vector<8x128xf32>
    %119 = arith.truncf %118 : vector<8x128xf32> to vector<8x128xbf16>
    %c3_73 = arith.constant 3 : index
    %c0_74 = arith.constant 0 : index
    %c0_75 = arith.constant 0 : index
    %120 = vector.load %arg5[%c3_73, %c0_74, %c0_75] : memref<5x8x8xbf16, #tpu.memory_space<vmem>>, vector<1x8x8xbf16>
    %121 = vector.shape_cast %120 : vector<1x8x8xbf16> to vector<8x8xbf16>
    %cst_76 = arith.constant dense<0.000000e+00> : vector<8x128xf32>
    %122 = tpu.matmul %121, %119, %cst_76 {dimension_numbers = #tpu.dot_dimension_numbers<[1], [0], [0], [1], [0, 0, 1, 1], [], []>} : vector<8x8xbf16>, vector<8x128xbf16>, vector<8x128xf32> -> vector<8x128xf32>
    %123 = arith.addf %113, %122 : vector<8x128xf32>
    %c126_i32_77 = arith.constant 126 : i32
    %124 = tpu.dynamic_rotate %85 by %c126_i32_77 dim 1 : vector<8x128xf32>, i32 -> vector<8x128xf32>
    %c4_78 = arith.constant 4 : index
    %c0_79 = arith.constant 0 : index
    %c0_80 = arith.constant 0 : index
    %125 = vector.load %arg1[%c4_78, %c0_79, %c0_80] : memref<5x1x128xf32, #tpu.memory_space<vmem>>, vector<1x1x128xf32>
    %126 = vector.shape_cast %125 : vector<1x1x128xf32> to vector<1x128xf32>
    %127 = vector.broadcast %126 : vector<1x128xf32> to vector<8x128xf32>
    %128 = arith.mulf %124, %127 : vector<8x128xf32>
    %129 = arith.truncf %128 : vector<8x128xf32> to vector<8x128xbf16>
    %c4_81 = arith.constant 4 : index
    %c0_82 = arith.constant 0 : index
    %c0_83 = arith.constant 0 : index
    %130 = vector.load %arg5[%c4_81, %c0_82, %c0_83] : memref<5x8x8xbf16, #tpu.memory_space<vmem>>, vector<1x8x8xbf16>
    %131 = vector.shape_cast %130 : vector<1x8x8xbf16> to vector<8x8xbf16>
    %cst_84 = arith.constant dense<0.000000e+00> : vector<8x128xf32>
    %132 = tpu.matmul %131, %129, %cst_84 {dimension_numbers = #tpu.dot_dimension_numbers<[1], [0], [0], [1], [0, 0, 1, 1], [], []>} : vector<8x8xbf16>, vector<8x128xbf16>, vector<8x128xf32> -> vector<8x128xf32>
    %133 = arith.addf %123, %132 : vector<8x128xf32>
    %c0_85 = arith.constant 0 : index
    %c3_86 = arith.constant 3 : index
    %134 = vector.load %arg3[%c0_85, %c3_86] : memref<8x16xf32, #tpu.memory_space<vmem>>, vector<8x1xf32>
    %135 = vector.broadcast %134 : vector<8x1xf32> to vector<8x128xf32>
    %136 = arith.addf %133, %135 : vector<8x128xf32>
    %137 = vector.broadcast %0 : vector<1x128xf32> to vector<8x128xf32>
    %138 = arith.mulf %136, %137 : vector<8x128xf32>
    %cst_87 = arith.constant dense<0.000000e+00> : vector<8xf32>
    %139 = vector.multi_reduction <add>, %138, %cst_87 [1] : vector<8x128xf32> to vector<8xf32>
    %140 = vector.shape_cast %139 : vector<8xf32> to vector<8x1xf32>
    %cst_88 = arith.constant 1.562500e-02 : f32
    %141 = vector.broadcast %cst_88 : f32 to vector<8x1xf32>
    %142 = arith.mulf %140, %141 : vector<8x1xf32>
    %143 = vector.broadcast %142 : vector<8x1xf32> to vector<8x128xf32>
    %144 = arith.subf %136, %143 : vector<8x128xf32>
    %145 = vector.broadcast %0 : vector<1x128xf32> to vector<8x128xf32>
    %146 = arith.mulf %144, %145 : vector<8x128xf32>
    %147 = arith.mulf %146, %146 : vector<8x128xf32>
    %cst_89 = arith.constant dense<0.000000e+00> : vector<8xf32>
    %148 = vector.multi_reduction <add>, %147, %cst_89 [1] : vector<8x128xf32> to vector<8xf32>
    %149 = vector.shape_cast %148 : vector<8xf32> to vector<8x1xf32>
    %cst_90 = arith.constant 1.562500e-02 : f32
    %150 = vector.broadcast %cst_90 : f32 to vector<8x1xf32>
    %151 = arith.mulf %149, %150 : vector<8x1xf32>
    %152 = vector.broadcast %142 : vector<8x1xf32> to vector<8x128xf32>
    %153 = arith.subf %136, %152 : vector<8x128xf32>
    %cst_91 = arith.constant 9.99999974E-6 : f32
    %154 = vector.broadcast %cst_91 : f32 to vector<8x1xf32>
    %155 = arith.addf %151, %154 : vector<8x1xf32>
    %156 = math.rsqrt %155 : vector<8x1xf32>
    %157 = vector.broadcast %156 : vector<8x1xf32> to vector<8x128xf32>
    %158 = arith.mulf %153, %157 : vector<8x128xf32>
    %c0_92 = arith.constant 0 : index
    %c4_93 = arith.constant 4 : index
    %159 = vector.load %arg3[%c0_92, %c4_93] : memref<8x16xf32, #tpu.memory_space<vmem>>, vector<8x1xf32>
    %160 = vector.broadcast %159 : vector<8x1xf32> to vector<8x128xf32>
    %161 = arith.mulf %158, %160 : vector<8x128xf32>
    %c0_94 = arith.constant 0 : index
    %c5 = arith.constant 5 : index
    %162 = vector.load %arg3[%c0_94, %c5] : memref<8x16xf32, #tpu.memory_space<vmem>>, vector<8x1xf32>
    %163 = vector.broadcast %162 : vector<8x1xf32> to vector<8x128xf32>
    %164 = arith.addf %161, %163 : vector<8x128xf32>
    %c0_95 = arith.constant 0 : index
    %c0_96 = arith.constant 0 : index
    %165 = vector.load %arg6[%c0_95, %c0_96] : memref<8x8xbf16, #tpu.memory_space<vmem>>, vector<8x8xbf16>
    %166 = arith.truncf %1 : vector<8x128xf32> to vector<8x128xbf16>
    %cst_97 = arith.constant dense<0.000000e+00> : vector<8x128xf32>
    %167 = tpu.matmul %165, %166, %cst_97 {dimension_numbers = #tpu.dot_dimension_numbers<[1], [0], [0], [1], [0, 0, 1, 1], [], []>} : vector<8x8xbf16>, vector<8x128xbf16>, vector<8x128xf32> -> vector<8x128xf32>
    %c0_98 = arith.constant 0 : index
    %c6 = arith.constant 6 : index
    %168 = vector.load %arg3[%c0_98, %c6] : memref<8x16xf32, #tpu.memory_space<vmem>>, vector<8x1xf32>
    %169 = vector.broadcast %168 : vector<8x1xf32> to vector<8x128xf32>
    %170 = arith.addf %167, %169 : vector<8x128xf32>
    %171 = vector.broadcast %0 : vector<1x128xf32> to vector<8x128xf32>
    %172 = arith.mulf %170, %171 : vector<8x128xf32>
    %cst_99 = arith.constant dense<0.000000e+00> : vector<8xf32>
    %173 = vector.multi_reduction <add>, %172, %cst_99 [1] : vector<8x128xf32> to vector<8xf32>
    %174 = vector.shape_cast %173 : vector<8xf32> to vector<8x1xf32>
    %cst_100 = arith.constant 1.562500e-02 : f32
    %175 = vector.broadcast %cst_100 : f32 to vector<8x1xf32>
    %176 = arith.mulf %174, %175 : vector<8x1xf32>
    %177 = vector.broadcast %176 : vector<8x1xf32> to vector<8x128xf32>
    %178 = arith.subf %170, %177 : vector<8x128xf32>
    %179 = vector.broadcast %0 : vector<1x128xf32> to vector<8x128xf32>
    %180 = arith.mulf %178, %179 : vector<8x128xf32>
    %181 = arith.mulf %180, %180 : vector<8x128xf32>
    %cst_101 = arith.constant dense<0.000000e+00> : vector<8xf32>
    %182 = vector.multi_reduction <add>, %181, %cst_101 [1] : vector<8x128xf32> to vector<8xf32>
    %183 = vector.shape_cast %182 : vector<8xf32> to vector<8x1xf32>
    %cst_102 = arith.constant 1.562500e-02 : f32
    %184 = vector.broadcast %cst_102 : f32 to vector<8x1xf32>
    %185 = arith.mulf %183, %184 : vector<8x1xf32>
    %186 = vector.broadcast %176 : vector<8x1xf32> to vector<8x128xf32>
    %187 = arith.subf %170, %186 : vector<8x128xf32>
    %cst_103 = arith.constant 9.99999974E-6 : f32
    %188 = vector.broadcast %cst_103 : f32 to vector<8x1xf32>
    %189 = arith.addf %185, %188 : vector<8x1xf32>
    %190 = math.rsqrt %189 : vector<8x1xf32>
    %191 = vector.broadcast %190 : vector<8x1xf32> to vector<8x128xf32>
    %192 = arith.mulf %187, %191 : vector<8x128xf32>
    %c0_104 = arith.constant 0 : index
    %c7 = arith.constant 7 : index
    %193 = vector.load %arg3[%c0_104, %c7] : memref<8x16xf32, #tpu.memory_space<vmem>>, vector<8x1xf32>
    %194 = vector.broadcast %193 : vector<8x1xf32> to vector<8x128xf32>
    %195 = arith.mulf %192, %194 : vector<8x128xf32>
    %c0_105 = arith.constant 0 : index
    %c8 = arith.constant 8 : index
    %196 = vector.load %arg3[%c0_105, %c8] : memref<8x16xf32, #tpu.memory_space<vmem>>, vector<8x1xf32>
    %197 = vector.broadcast %196 : vector<8x1xf32> to vector<8x128xf32>
    %198 = arith.addf %195, %197 : vector<8x128xf32>
    %199 = arith.addf %164, %198 : vector<8x128xf32>
    %cst_106 = arith.constant 0.000000e+00 : f32
    %200 = vector.broadcast %cst_106 : f32 to vector<8x128xf32>
    %201 = arith.cmpf oge, %199, %200 : vector<8x128xf32>
    %cst_107 = arith.constant 2.000000e-01 : f32
    %202 = vector.broadcast %cst_107 : f32 to vector<8x128xf32>
    %203 = arith.mulf %202, %199 : vector<8x128xf32>
    %204 = arith.select %201, %199, %203 : vector<8x128xi1>, vector<8x128xf32>
    %c0_108 = arith.constant 0 : index
    %c0_109 = arith.constant 0 : index
    %205 = vector.load %arg7[%c0_108, %c0_109] : memref<8x128xf32, #tpu.memory_space<vmem>>, vector<8x128xf32>
    tpu.vector_store %arg7[%c0_108, %c0_109], %204 {strides = array<i32>} : memref<8x128xf32, #tpu.memory_space<vmem>>, vector<8x128xf32>,
    return
  }
}

</mosaic_0001>

<llo_original>
// kernel: tpu_custom_call.1
$region0: #{tpu_custom_call.1}
  #allocation0 [shape = 'u32[]', space=smem, size = 0x4, offset = 0x4, fixed_abs, tag = 'smem constant byte address 0x4 - core index']
  #allocation1 [shape = 'u32[72,128]{1,0:T(1,128)}', space=vmem, size = 0x9000, scoped, tag = 'internal scratch']
  %s0 = inlined_call_operand.hbm [shape: f32[8,128], index: 0, kind: input, shape index: {}]
  %s1 = inlined_call_operand.hbm [shape: f32[5,1,128], index: 1, kind: input, shape index: {}]
  %s2 = inlined_call_operand.vmem [shape: f32[1,128], index: 2, kind: input, shape index: {}]
  %s3 = inlined_call_operand.hbm [shape: f32[8,16], index: 3, kind: input, shape index: {}]
  %s4 = inlined_call_operand.hbm [shape: bf16[5,8,8], index: 4, kind: input, shape index: {}]
  %s5 = inlined_call_operand.hbm [shape: bf16[5,8,8], index: 5, kind: input, shape index: {}]
  %s6 = inlined_call_operand.vmem [shape: bf16[8,8], index: 6, kind: input, shape index: {}]
  %s7 = inlined_call_operand.hbm [shape: f32[8,128], index: 7, kind: output, shape index: {}]
  %s8 = sld [smem:[#allocation0]]
  $region58: #{tpu_custom_call.1} parent=0
    _
  %s10 = ssub.s32 1, %s8
  %s11 = scalar_select 0, %s10, %s8
  $region1: #{tpu_custom_call.1} parent=0
    #allocation2 [shape = 'u8[4096]{0}', space=vmem, size = 0x1000, scoped, tag = 'input window, operand 0, single buffered']
    #allocation3 [shape = 's32[1]{0}', space=sflag, size = 0x4, scoped, tag = 'scoped memory for tpu_custom_call.1']
    #allocation4 [shape = 's32[1]{0}', space=sflag, size = 0x4, scoped, tag = 'scoped memory for tpu_custom_call.1']
    #allocation5 [shape = 'u8[2560]{0}', space=vmem, size = 0xc00, scoped, tag = 'input window, operand 1, single buffered']
    #allocation6 [shape = 's32[1]{0}', space=sflag, size = 0x4, scoped, tag = 'scoped memory for tpu_custom_call.1']
    #allocation7 [shape = 'u8[4096]{0}', space=vmem, size = 0x1000, scoped, tag = 'input window, operand 3, single buffered']
    #allocation8 [shape = 'u8[10240]{0}', space=vmem, size = 0x2800, scoped, tag = 'input window, operand 4, single buffered']
    #allocation9 [shape = 's32[1]{0}', space=sflag, size = 0x4, scoped, tag = 'scoped memory for tpu_custom_call.1']
    #allocation10 [shape = 'u8[10240]{0}', space=vmem, size = 0x2800, scoped, tag = 'input window, operand 5, single buffered']
    #allocation11 [shape = 'u8[4096]{0}', space=vmem, size = 0x1000, scoped, tag = 'output window, operand 0, single buffered']
    %12 = vsyncpa [#allocation3], 0
    %13 = vsyncpa [#allocation6], 0
    %14 = vsyncpa [#allocation9], 0
    %15 = vsyncpa [#allocation4], 0
    // Predicated region
    $region2: #{tpu_custom_call.1} parent=1 // pred_check
      _
    $region3: #{tpu_custom_call.1} parent=1 // pred_check_branch
      %17 = sbr.rel (0) target = $region5
    $region4: #{tpu_custom_call.1} parent=1 // pred_region
      %19 = vsyncadd [#allocation3], 0
      %s21 = sshll.u32 %s0, 4
      %s22 = int_to_ptr.hbm [resolvable:$true] %s21
      %s23 = sshll.u32 [#allocation2], 4
      %s24 = int_to_ptr.vmem [resolvable:$true] %s23
      %26 = dma.hbm_to_vmem [thread:$0]  %s22, 128, %s24, [#allocation3]
    $region5: #{tpu_custom_call.1} parent=1 // pred_fallthru
      _
    // Predicated region
    $region6: #{tpu_custom_call.1} parent=1 // pred_check
      _
    $region7: #{tpu_custom_call.1} parent=1 // pred_check_branch
      %28 = sbr.rel (0) target = $region9
    $region8: #{tpu_custom_call.1} parent=1 // pred_region
      %30 = vsyncadd [#allocation6], 0
      %s31 = sshll.u32 %s1, 4
      %s32 = int_to_ptr.hbm [resolvable:$true] %s31
      %s33 = sshll.u32 [#allocation5], 4
      %s34 = int_to_ptr.vmem [resolvable:$true] %s33
      %39 = dma.hbm_to_vmem [thread:$0]  %s32, 80, %s34, [#allocation6], 16, 16, 1
    $region9: #{tpu_custom_call.1} parent=1 // pred_fallthru
      _
    // Predicated region
    $region10: #{tpu_custom_call.1} parent=1 // pred_check
      _
    $region11: #{tpu_custom_call.1} parent=1 // pred_check_branch
      %41 = sbr.rel (0) target = $region13
    $region12: #{tpu_custom_call.1} parent=1 // pred_region
      _
    $region13: #{tpu_custom_call.1} parent=1 // pred_fallthru
      _
    // Predicated region
    $region14: #{tpu_custom_call.1} parent=1 // pred_check
      _
    $region15: #{tpu_custom_call.1} parent=1 // pred_check_branch
      %43 = sbr.rel (0) target = $region17
    $region16: #{tpu_custom_call.1} parent=1 // pred_region
      %45 = vsyncadd [#allocation6], 0
      %s47 = sshll.u32 %s3, 4
      %s48 = int_to_ptr.hbm [resolvable:$true] %s47
      %s49 = sshll.u32 [#allocation7], 4
      %s50 = int_to_ptr.vmem [resolvable:$true] %s49
      %52 = dma.hbm_to_vmem [thread:$0]  %s48, 128, %s50, [#allocation6]
    $region17: #{tpu_custom_call.1} parent=1 // pred_fallthru
      _
    // Predicated region
    $region18: #{tpu_custom_call.1} parent=1 // pred_check
      _
    $region19: #{tpu_custom_call.1} parent=1 // pred_check_branch
      %54 = sbr.rel (0) target = $region21
    $region20: #{tpu_custom_call.1} parent=1 // pred_region
      %56 = vsyncadd [#allocation9], 0
      %s57 = sshll.u32 %s4, 4
      %s58 = int_to_ptr.hbm [resolvable:$true] %s57
      %s59 = sshll.u32 [#allocation8], 4
      %s60 = int_to_ptr.vmem [resolvable:$true] %s59
      %65 = dma.hbm_to_vmem [thread:$0]  %s58, 320, %s60, [#allocation9], 64, 64, 4
    $region21: #{tpu_custom_call.1} parent=1 // pred_fallthru
      _
    // Predicated region
    $region22: #{tpu_custom_call.1} parent=1 // pred_check
      _
    $region23: #{tpu_custom_call.1} parent=1 // pred_check_branch
      %67 = sbr.rel (0) target = $region25
    $region24: #{tpu_custom_call.1} parent=1 // pred_region
      %69 = vsyncadd [#allocation9], 0
      %s70 = sshll.u32 %s5, 4
      %s71 = int_to_ptr.hbm [resolvable:$true] %s70
      %s72 = sshll.u32 [#allocation10], 4
      %s73 = int_to_ptr.vmem [resolvable:$true] %s72
      %78 = dma.hbm_to_vmem [thread:$0]  %s71, 320, %s73, [#allocation9], 64, 64, 4
    $region25: #{tpu_custom_call.1} parent=1 // pred_fallthru
      _
    // Predicated region
    $region26: #{tpu_custom_call.1} parent=1 // pred_check
      _
    $region27: #{tpu_custom_call.1} parent=1 // pred_check_branch
      %80 = sbr.rel (0) target = $region29
    $region28: #{tpu_custom_call.1} parent=1 // pred_region
      _
    $region29: #{tpu_custom_call.1} parent=1 // pred_fallthru
      _
    // Predicated region
    $region30: #{tpu_custom_call.1} parent=1 // pred_check
      _
    $region31: #{tpu_custom_call.1} parent=1 // pred_check_branch
      %82 = sbr.rel (0) target = $region33
    $region32: #{tpu_custom_call.1} parent=1 // pred_region
      %84 = dma.done [#allocation3], 128
    $region33: #{tpu_custom_call.1} parent=1 // pred_fallthru
      _
    // Predicated region
    $region34: #{tpu_custom_call.1} parent=1 // pred_check
      _
    $region35: #{tpu_custom_call.1} parent=1 // pred_check_branch
      %86 = sbr.rel (0) target = $region37
    $region36: #{tpu_custom_call.1} parent=1 // pred_region
      %88 = dma.done [#allocation6], 80
    $region37: #{tpu_custom_call.1} parent=1 // pred_fallthru
      _
    // Predicated region
    $region38: #{tpu_custom_call.1} parent=1 // pred_check
      _
    $region39: #{tpu_custom_call.1} parent=1 // pred_check_branch
      %90 = sbr.rel (0) target = $region41
    $region40: #{tpu_custom_call.1} parent=1 // pred_region
      %92 = dma.done [#allocation6], 128
    $region41: #{tpu_custom_call.1} parent=1 // pred_fallthru
      _
    // Predicated region
    $region42: #{tpu_custom_call.1} parent=1 // pred_check
      _
    $region43: #{tpu_custom_call.1} parent=1 // pred_check_branch
      %94 = sbr.rel (0) target = $region45
    $region44: #{tpu_custom_call.1} parent=1 // pred_region
      %96 = dma.done [#allocation9], 320
    $region45: #{tpu_custom_call.1} parent=1 // pred_fallthru
      _
    // Predicated region
    $region46: #{tpu_custom_call.1} parent=1 // pred_check
      _
    $region47: #{tpu_custom_call.1} parent=1 // pred_check_branch
      %98 = sbr.rel (0) target = $region49
    $region48: #{tpu_custom_call.1} parent=1 // pred_region
      %100 = dma.done [#allocation9], 320
    $region49: #{tpu_custom_call.1} parent=1 // pred_fallthru
      _
    %v102 = vld [vmem:[%s2] sm:$0x1]
    %v103 = vld [vmem:[#allocation2] sm:$0xff]
    %104 = vrot.lane.b32.xlu0 %v103, 2
    %v105 = vpop.permute.xlu0 %104
    %v106 = vld [vmem:[#allocation5] sm:$0x1]
    %v108 = vperm.slane %v106, 0
    %v110 = vmul.f32 %v105, %v108
    %v111 = vpack.c.bf16 %v110, %v110
    %v112 = vld [vmem:[#allocation8] sm:$0xf]
    %113 = vrot.lane.b32.xlu0 %v103, 1
    %v114 = vpop.permute.xlu0 %113
    %s115 = scalar_lea.vmem [#allocation5], 1
    %v116 = vld [vmem:[%s115] sm:$0x1]
    %v118 = vperm.slane %v116, 0
    %v120 = vmul.f32 %v114, %v118
    %v121 = vpack.c.bf16 %v120, %v120
    %s122 = scalar_lea.vmem [#allocation8], 4
    %v123 = vld [vmem:[%s122] sm:$0xf]
    %vm124 = vcmask 64512
    %v126 = vsel %vm124, %v123, 0
    %vm128 = vcmask 1043456
    %v130 = vsel %vm128, %v121, 0
    %132 = vmatpush.bf16.msra.mxu0 0
    %133 = vmatpush.bf16.msra.mxu0 0
    %134 = vmatpush.bf16.msra.mxu0 0
    %135 = vmatpush.bf16.msra.mxu0 0
    %136 = vmatpush.bf16.msra.mxu0 0
    %137 = vmatpush.bf16.msra.mxu0 0
    %138 = vmatpush.bf16.msra.mxu0 0
    %139 = vmatpush.bf16.msra.mxu0 %v130
    %140 = vmatmul.bf16.gmra.mxu0 %v126
    %v141 = vpop.f32.mrf.mxu0
    %v142 = vadd.f32 0.0, %v141
    %v143 = vpop.f32.mrf.mxu0
    %144 = vdwg.mxu0
    %v146 = vsel %vm124, %v112, 0
    %v149 = vsel %vm128, %v111, 0
    %151 = vmatpush.bf16.msra.mxu0 0
    %152 = vmatpush.bf16.msra.mxu0 0
    %153 = vmatpush.bf16.msra.mxu0 0
    %154 = vmatpush.bf16.msra.mxu0 0
    %155 = vmatpush.bf16.msra.mxu0 0
    %156 = vmatpush.bf16.msra.mxu0 0
    %157 = vmatpush.bf16.msra.mxu0 0
    %158 = vmatpush.bf16.msra.mxu0 %v149
    %159 = vmatmul.bf16.gmra.mxu0 %v146
    %v160 = vpop.f32.mrf.mxu0
    %v161 = vadd.f32 %v142, %v160
    %v162 = vpop.f32.mrf.mxu0
    %163 = vdwg.mxu0
    %s164 = scalar_lea.vmem [#allocation5], 2
    %v165 = vld [vmem:[%s164] sm:$0x1]
    %v167 = vperm.slane %v165, 0
    %v169 = vmul.f32 %v103, %v167
    %v170 = vpack.c.bf16 %v169, %v169
    %s171 = scalar_lea.vmem [#allocation8], 8
    %v172 = vld [vmem:[%s171] sm:$0xf]
    %v174 = vsel %vm124, %v172, 0
    %v177 = vsel %vm128, %v170, 0
    %179 = vmatpush.bf16.msra.mxu0 0
    %180 = vmatpush.bf16.msra.mxu0 0
    %181 = vmatpush.bf16.msra.mxu0 0
    %182 = vmatpush.bf16.msra.mxu0 0
    %183 = vmatpush.bf16.msra.mxu0 0
    %184 = vmatpush.bf16.msra.mxu0 0
    %185 = vmatpush.bf16.msra.mxu0 0
    %186 = vmatpush.bf16.msra.mxu0 %v177
    %187 = vmatmul.bf16.gmra.mxu0 %v174
    %v188 = vpop.f32.mrf.mxu0
    %v189 = vadd.f32 0.0, %v188
    %v190 = vpop.f32.mrf.mxu0
    %191 = vdwg.mxu0
    %v192 = vadd.f32 %v161, %v189
    %193 = vrot.lane.b32.xlu0 %v103, 127
    %v194 = vpop.permute.xlu0 %193
    %s195 = scalar_lea.vmem [#allocation5], 3
    %v196 = vld [vmem:[%s195] sm:$0x1]
    %v198 = vperm.slane %v196, 0
    %v200 = vmul.f32 %v194, %v198
    %v201 = vpack.c.bf16 %v200, %v200
    %s202 = scalar_lea.vmem [#allocation8], 12
    %v203 = vld [vmem:[%s202] sm:$0xf]
    %v205 = vsel %vm124, %v203, 0
    %v208 = vsel %vm128, %v201, 0
    %210 = vmatpush.bf16.msra.mxu0 0
    %211 = vmatpush.bf16.msra.mxu0 0
    %212 = vmatpush.bf16.msra.mxu0 0
    %213 = vmatpush.bf16.msra.mxu0 0
    %214 = vmatpush.bf16.msra.mxu0 0
    %215 = vmatpush.bf16.msra.mxu0 0
    %216 = vmatpush.bf16.msra.mxu0 0
    %217 = vmatpush.bf16.msra.mxu0 %v208
    %218 = vmatmul.bf16.gmra.mxu0 %v205
    %v219 = vpop.f32.mrf.mxu0
    %v220 = vadd.f32 0.0, %v219
    %v221 = vpop.f32.mrf.mxu0
    %222 = vdwg.mxu0
    %v223 = vadd.f32 %v192, %v220
    %224 = vrot.lane.b32.xlu0 %v103, 126
    %v225 = vpop.permute.xlu0 %224
    %s226 = scalar_lea.vmem [#allocation5], 4
    %v227 = vld [vmem:[%s226] sm:$0x1]
    %v229 = vperm.slane %v227, 0
    %v231 = vmul.f32 %v225, %v229
    %v232 = vpack.c.bf16 %v231, %v231
    %s233 = scalar_lea.vmem [#allocation8], 16
    %v234 = vld [vmem:[%s233] sm:$0xf]
    %v236 = vsel %vm124, %v234, 0
    %v239 = vsel %vm128, %v232, 0
    %241 = vmatpush.bf16.msra.mxu0 0
    %242 = vmatpush.bf16.msra.mxu0 0
    %243 = vmatpush.bf16.msra.mxu0 0
    %244 = vmatpush.bf16.msra.mxu0 0
    %245 = vmatpush.bf16.msra.mxu0 0
    %246 = vmatpush.bf16.msra.mxu0 0
    %247 = vmatpush.bf16.msra.mxu0 0
    %248 = vmatpush.bf16.msra.mxu0 %v239
    %249 = vmatmul.bf16.gmra.mxu0 %v236
    %v250 = vpop.f32.mrf.mxu0
    %v251 = vadd.f32 0.0, %v250
    %v252 = vpop.f32.mrf.mxu0
    %253 = vdwg.mxu0
    %v254 = vadd.f32 %v223, %v251
    %v255 = vld [vmem:[#allocation7] sm:$0xff]
    %257 = vset.pattern.permute.xlu0 0
    %258 = vperm.xlu0 %257, %v255
    %v259 = vpop.permute.xlu0 %258
    %v261 = vadd.f32 %v254, %v259
    %v263 = vperm.slane %v102, 0
    %v265 = vmul.f32 %v261, %v263
    %266 = vadd.xlane.f32.xlu0 %v265
    %v267 = vpop.xlane.xlu0 %266
    %v268 = vmul.f32 %v267, 0.015625
    %v269 = vsub.f32 %v261, %v268
    %v270 = vmul.f32 %v269, %v263
    %v271 = vmul.f32 %v270, %v270
    %272 = vadd.xlane.f32.xlu0 %v271
    %v273 = vpop.xlane.xlu0 %272
    %v274 = vmul.f32 %v273, 0.015625
    %v275 = vadd.f32 %v274, 1e-05
    %v276 = vrsqrt.pop %v275
    %v277 = vmul.f32 %v276, %v275
    %v278 = vmul.f32 %v277, %v276
    %v279 = vmul.f32 0.5, %v278
    %v280 = vsub.f32 1.5, %v279
    %v281 = vmul.f32 %v276, %v280
    %vm282 = vweird.f32 %v275
    %vm283 = vweird.f32 %v276
    %vm284 = vmor %vm282, %vm283
    %v285 = vsel %vm284, %v276, %v281
    %v286 = vmul.f32 %v269, %v285
    %287 = vset.pattern.permute.xlu0 1
    %288 = vperm.xlu0 %287, %v255
    %v289 = vpop.permute.xlu0 %288
    %v291 = vmul.f32 %v286, %v289
    %292 = vset.pattern.permute.xlu0 2
    %293 = vperm.xlu0 %292, %v255
    %v294 = vpop.permute.xlu0 %293
    %v296 = vadd.f32 %v291, %v294
    %vm297 = vcmp.ge.f32.partialorder %v296, 0.0
    %v298 = vmul.f32 %v296, 0.2
    %v299 = vsel %vm297, %v296, %v298
    %300 = vrot.lane.b32.xlu0 %v299, 2
    %v301 = vpop.permute.xlu0 %300
    %v302 = vmul.f32 %v301, %v108
    %v303 = vpack.c.bf16 %v302, %v302
    %v304 = vld [vmem:[#allocation10] sm:$0xf]
    %305 = vrot.lane.b32.xlu0 %v299, 1
    %v306 = vpop.permute.xlu0 %305
    %v307 = vmul.f32 %v306, %v118
    %v308 = vpack.c.bf16 %v307, %v307
    %s309 = scalar_lea.vmem [#allocation10], 4
    %v310 = vld [vmem:[%s309] sm:$0xf]
    %v312 = vsel %vm124, %v310, 0
    %v315 = vsel %vm128, %v308, 0
    %317 = vmatpush.bf16.msra.mxu0 0
    %318 = vmatpush.bf16.msra.mxu0 0
    %319 = vmatpush.bf16.msra.mxu0 0
    %320 = vmatpush.bf16.msra.mxu0 0
    %321 = vmatpush.bf16.msra.mxu0 0
    %322 = vmatpush.bf16.msra.mxu0 0
    %323 = vmatpush.bf16.msra.mxu0 0
    %324 = vmatpush.bf16.msra.mxu0 %v315
    %325 = vmatmul.bf16.gmra.mxu0 %v312
    %v326 = vpop.f32.mrf.mxu0
    %v327 = vadd.f32 0.0, %v326
    %v328 = vpop.f32.mrf.mxu0
    %329 = vdwg.mxu0
    %v331 = vsel %vm124, %v304, 0
    %v334 = vsel %vm128, %v303, 0
    %336 = vmatpush.bf16.msra.mxu0 0
    %337 = vmatpush.bf16.msra.mxu0 0
    %338 = vmatpush.bf16.msra.mxu0 0
    %339 = vmatpush.bf16.msra.mxu0 0
    %340 = vmatpush.bf16.msra.mxu0 0
    %341 = vmatpush.bf16.msra.mxu0 0
    %342 = vmatpush.bf16.msra.mxu0 0
    %343 = vmatpush.bf16.msra.mxu0 %v334
    %344 = vmatmul.bf16.gmra.mxu0 %v331
    %v345 = vpop.f32.mrf.mxu0
    %v346 = vadd.f32 %v327, %v345
    %v347 = vpop.f32.mrf.mxu0
    %348 = vdwg.mxu0
    %v349 = vmul.f32 %v299, %v167
    %v350 = vpack.c.bf16 %v349, %v349
    %s351 = scalar_lea.vmem [#allocation10], 8
    %v352 = vld [vmem:[%s351] sm:$0xf]
    %v354 = vsel %vm124, %v352, 0
    %v357 = vsel %vm128, %v350, 0
    %359 = vmatpush.bf16.msra.mxu0 0
    %360 = vmatpush.bf16.msra.mxu0 0
    %361 = vmatpush.bf16.msra.mxu0 0
    %362 = vmatpush.bf16.msra.mxu0 0
    %363 = vmatpush.bf16.msra.mxu0 0
    %364 = vmatpush.bf16.msra.mxu0 0
    %365 = vmatpush.bf16.msra.mxu0 0
    %366 = vmatpush.bf16.msra.mxu0 %v357
    %367 = vmatmul.bf16.gmra.mxu0 %v354
    %v368 = vpop.f32.mrf.mxu0
    %v369 = vadd.f32 0.0, %v368
    %v370 = vpop.f32.mrf.mxu0
    %371 = vdwg.mxu0
    %v372 = vadd.f32 %v346, %v369
    %373 = vrot.lane.b32.xlu0 %v299, 127
    %v374 = vpop.permute.xlu0 %373
    %v375 = vmul.f32 %v374, %v198
    %v376 = vpack.c.bf16 %v375, %v375
    %s377 = scalar_lea.vmem [#allocation10], 12
    %v378 = vld [vmem:[%s377] sm:$0xf]
    %v380 = vsel %vm124, %v378, 0
    %v383 = vsel %vm128, %v376, 0
    %385 = vmatpush.bf16.msra.mxu0 0
    %386 = vmatpush.bf16.msra.mxu0 0
    %387 = vmatpush.bf16.msra.mxu0 0
    %388 = vmatpush.bf16.msra.mxu0 0
    %389 = vmatpush.bf16.msra.mxu0 0
    %390 = vmatpush.bf16.msra.mxu0 0
    %391 = vmatpush.bf16.msra.mxu0 0
    %392 = vmatpush.bf16.msra.mxu0 %v383
    %393 = vmatmul.bf16.gmra.mxu0 %v380
    %v394 = vpop.f32.mrf.mxu0
    %v395 = vadd.f32 0.0, %v394
    %v396 = vpop.f32.mrf.mxu0
    %397 = vdwg.mxu0
    %v398 = vadd.f32 %v372, %v395
    %399 = vrot.lane.b32.xlu0 %v299, 126
    %v400 = vpop.permute.xlu0 %399
    %v401 = vmul.f32 %v400, %v229
    %v402 = vpack.c.bf16 %v401, %v401
    %s403 = scalar_lea.vmem [#allocation10], 16
    %v404 = vld [vmem:[%s403] sm:$0xf]
    %v406 = vsel %vm124, %v404, 0
    %v409 = vsel %vm128, %v402, 0
    %411 = vmatpush.bf16.msra.mxu0 0
    %412 = vmatpush.bf16.msra.mxu0 0
    %413 = vmatpush.bf16.msra.mxu0 0
    %414 = vmatpush.bf16.msra.mxu0 0
    %415 = vmatpush.bf16.msra.mxu0 0
    %416 = vmatpush.bf16.msra.mxu0 0
    %417 = vmatpush.bf16.msra.mxu0 0
    %418 = vmatpush.bf16.msra.mxu0 %v409
    %419 = vmatmul.bf16.gmra.mxu0 %v406
    %v420 = vpop.f32.mrf.mxu0
    %v421 = vadd.f32 0.0, %v420
    %v422 = vpop.f32.mrf.mxu0
    %423 = vdwg.mxu0
    %v424 = vadd.f32 %v398, %v421
    %425 = vset.pattern.permute.xlu0 3
    %426 = vperm.xlu0 %425, %v255
    %v427 = vpop.permute.xlu0 %426
    %v429 = vadd.f32 %v424, %v427
    %v430 = vmul.f32 %v429, %v263
    %431 = vadd.xlane.f32.xlu0 %v430
    %v432 = vpop.xlane.xlu0 %431
    %v433 = vmul.f32 %v432, 0.015625
    %v434 = vsub.f32 %v429, %v433
    %v435 = vmul.f32 %v434, %v263
    %v436 = vmul.f32 %v435, %v435
    %437 = vadd.xlane.f32.xlu0 %v436
    %v438 = vpop.xlane.xlu0 %437
    %v439 = vmul.f32 %v438, 0.015625
    %v440 = vadd.f32 %v439, 1e-05
    %v441 = vrsqrt.pop %v440
    %v442 = vmul.f32 %v441, %v440
    %v443 = vmul.f32 %v442, %v441
    %v444 = vmul.f32 0.5, %v443
    %v445 = vsub.f32 1.5, %v444
    %v446 = vmul.f32 %v441, %v445
    %vm447 = vweird.f32 %v440
    %vm448 = vweird.f32 %v441
    %vm449 = vmor %vm447, %vm448
    %v450 = vsel %vm449, %v441, %v446
    %v451 = vmul.f32 %v434, %v450
    %452 = vset.pattern.permute.xlu0 4
    %453 = vperm.xlu0 %452, %v255
    %v454 = vpop.permute.xlu0 %453
    %v456 = vmul.f32 %v451, %v454
    %457 = vset.pattern.permute.xlu0 5
    %458 = vperm.xlu0 %457, %v255
    %v459 = vpop.permute.xlu0 %458
    %v461 = vadd.f32 %v456, %v459
    %v462 = vld [vmem:[%s6] sm:$0xf]
    %v463 = vpack.c.bf16 %v103, %v103
    %464 = vset.pattern.permute.xlu0 6
    %465 = vperm.xlu0 %464, %v255
    %v466 = vpop.permute.xlu0 %465
    %v469 = vsel %vm124, %v462, 0
    %v472 = vsel %vm128, %v463, 0
    %474 = vmatpush.bf16.msra.mxu0 0
    %475 = vmatpush.bf16.msra.mxu0 0
    %476 = vmatpush.bf16.msra.mxu0 0
    %477 = vmatpush.bf16.msra.mxu0 0
    %478 = vmatpush.bf16.msra.mxu0 0
    %479 = vmatpush.bf16.msra.mxu0 0
    %480 = vmatpush.bf16.msra.mxu0 0
    %481 = vmatpush.bf16.msra.mxu0 %v472
    %482 = vmatmul.bf16.gmra.mxu0 %v469
    %v483 = vpop.f32.mrf.mxu0
    %v484 = vadd.f32 %v466, %v483
    %v485 = vpop.f32.mrf.mxu0
    %486 = vdwg.mxu0
    %v487 = vmul.f32 %v484, %v263
    %488 = vadd.xlane.f32.xlu0 %v487
    %v489 = vpop.xlane.xlu0 %488
    %v490 = vmul.f32 %v489, 0.015625
    %v491 = vsub.f32 %v484, %v490
    %v492 = vmul.f32 %v491, %v263
    %v493 = vmul.f32 %v492, %v492
    %494 = vadd.xlane.f32.xlu0 %v493
    %v495 = vpop.xlane.xlu0 %494
    %v496 = vmul.f32 %v495, 0.015625
    %v497 = vadd.f32 %v496, 1e-05
    %v498 = vrsqrt.pop %v497
    %v499 = vmul.f32 %v498, %v497
    %v500 = vmul.f32 %v499, %v498
    %v501 = vmul.f32 0.5, %v500
    %v502 = vsub.f32 1.5, %v501
    %v503 = vmul.f32 %v498, %v502
    %vm504 = vweird.f32 %v497
    %vm505 = vweird.f32 %v498
    %vm506 = vmor %vm504, %vm505
    %v507 = vsel %vm506, %v498, %v503
    %v508 = vmul.f32 %v491, %v507
    %509 = vset.pattern.permute.xlu0 7
    %510 = vperm.xlu0 %509, %v255
    %v511 = vpop.permute.xlu0 %510
    %v513 = vmul.f32 %v508, %v511
    %514 = vset.pattern.permute.xlu0 8
    %515 = vperm.xlu0 %514, %v255
    %v516 = vpop.permute.xlu0 %515
    %v518 = vadd.f32 %v513, %v516
    %v519 = vadd.f32 %v461, %v518
    %vm520 = vcmp.ge.f32.partialorder %v519, 0.0
    %v521 = vmul.f32 %v519, 0.2
    %v522 = vsel %vm520, %v519, %v521
    %523 = vst [vmem:[#allocation11] sm:$0xff] %v522
    // Predicated region
    $region50: #{tpu_custom_call.1} parent=1 // pred_check
      _
    $region51: #{tpu_custom_call.1} parent=1 // pred_check_branch
      %525 = sbr.rel (0) target = $region53
    $region52: #{tpu_custom_call.1} parent=1 // pred_region
      %527 = vsyncadd [#allocation4], 0
      %s529 = sshll.u32 [#allocation11], 4
      %s530 = int_to_ptr.vmem [resolvable:$true] %s529
      %s531 = sshll.u32 %s7, 4
      %s532 = int_to_ptr.hbm [resolvable:$true] %s531
      %534 = dma.vmem_to_hbm [thread:$0]  %s530, 128, %s532, [#allocation4]
    $region53: #{tpu_custom_call.1} parent=1 // pred_fallthru
      _
    // Predicated region
    $region54: #{tpu_custom_call.1} parent=1 // pred_check
      _
    $region55: #{tpu_custom_call.1} parent=1 // pred_check_branch
      %536 = sbr.rel (0) target = $region57
    $region56: #{tpu_custom_call.1} parent=1 // pred_region
      %538 = dma.done [#allocation4], 128
    $region57: #{tpu_custom_call.1} parent=1 // pred_fallthru
      _
    %539 = vsyncpa [#allocation3], 1
    %540 = vsyncpa [#allocation6], 1
    %541 = vsyncpa [#allocation9], 1
    %542 = vsyncpa [#allocation4], 1

</llo_original>
